<compile_context>
chip_gen: v5e
topology: v5e:2x2
jax: 0.10.0
libtpu: 0.0.40
codegen_flags: <defaults>
</compile_context>

<pallas_src>
import jax
import jax.numpy as jnp
from jax.experimental import pallas as pl
from jax.experimental.pallas import tpu as pltpu

EPS = 1e-5


# Packed-parameter layout, shape (8, 2*Dp), f32:
#   row 0: [ gamma_identity | gamma_res1 ]
#   row 1: [ beta_identity  | beta_res1  ]
#   row 2: [ gamma_res2     | gamma_final]
#   row 3: [ beta_res2      | beta_final ]
#   rows 4..7: zero (sublane padding)
def deepe_block_kernel(x_ref, wcat_ref, w2_ref, p_ref, o_ref):
    dp = o_ref.shape[1]           # lane-padded output dim (multiple of 128)
    b = x_ref.shape[0]
    inv_n = 1.0 / b

    p = p_ref[...]                # one hoisted (8, 2*Dp) load
    ones8 = jnp.ones((8, b), jnp.float32)

    def bstats(h):
        # Batch sum / sum-of-squares on the MXU (sublane reductions would
        # burn VALU/XLU slots; the MXU has slack between the big matmuls).
        s = jnp.dot(ones8, h, preferred_element_type=jnp.float32)[0:1, :]
        sq = jnp.dot(ones8, h * h, preferred_element_type=jnp.float32)[0:1, :]
        mean = s * inv_n
        var = jnp.maximum(sq * inv_n - mean * mean, 0.0)
        return mean, var

    # ---- fused first matmul: x @ [ W_dim_map | W_res1 ]  (bf16 in, f32 acc) ----
    xw = jnp.dot(x_ref[...], wcat_ref[...], preferred_element_type=jnp.float32)

    # ---- identity_bn + res-BN1 stats in one wide (1, 2*Dp) reduction ----
    mean01, var01 = bstats(xw)
    scale01 = p[0:1, :] * jax.lax.rsqrt(var01 + EPS)
    shift01 = p[1:2, :] - mean01 * scale01

    # reslayer: BN1 (folded scale/shift) -> Dropout(0) -> ReLU
    h1 = jnp.maximum(xw[:, dp:] * scale01[:, dp:] + shift01[:, dp:], 0.0)

    # second Linear (bf16 MXU, f32 acc); bias cancels in the following BN
    h2 = jnp.dot(h1.astype(w2_ref.dtype), w2_ref[...],
                 preferred_element_type=jnp.float32)

    # res-BN2
    mean2, var2 = bstats(h2)
    scale2 = p[2:3, :dp] * jax.lax.rsqrt(var2 + EPS)
    shift2 = p[3:4, :dp] - mean2 * scale2

    # residual add: identity_bn applied lazily to the dim_map half of xw
    # (identity buffer never materialized), BN2 folded into the same fma pass.
    z = (xw[:, :dp] * scale01[:, :dp] + h2 * scale2
         + (shift01[:, :dp] + shift2))

    # final BN
    meanf, varf = bstats(z)
    scalef = p[2:3, dp:] * jax.lax.rsqrt(varf + EPS)
    shiftf = p[3:4, dp:] - meanf * scalef

    o_ref[...] = (z * scalef + shiftf).astype(o_ref.dtype)


def _round_up(n, m):
    return ((n + m - 1) // m) * m


def deepe_block(x, params, *, mxu_dtype=jnp.bfloat16):
    B, d_in = x.shape
    d_out = params["wmap"].shape[1]
    dp = _round_up(d_out, 128)        # lane-dense output dim (2*dp is 256-aligned)
    d_in_p = _round_up(d_in, 128)     # lane-dense contraction dim
    pad_c = dp - d_out
    pad_k = d_in_p - d_in

    def pad_w(w):                     # (d_in, d_out) -> (d_in_p, dp), zero pad
        return jnp.pad(w, ((0, pad_k), (0, pad_c)))

    def pad_row(r, fill=0.0):         # (1, d_out) -> (1, dp)
        return jnp.pad(r, ((0, 0), (0, pad_c)), constant_values=fill)

    # Fused + padded weights (bf16 MXU operands). Padded output columns are
    # all-zero; padded contraction rows are all-zero. w2 is zero-padded in
    # BOTH dims so padded hidden columns cannot contaminate the second matmul.
    wcat = jnp.concatenate([pad_w(params["wmap"]), pad_w(params["w1"])],
                           axis=1).astype(mxu_dtype)
    w2 = jnp.pad(params["w2"], ((0, pad_c), (0, pad_c))).astype(mxu_dtype)
    x_p = jnp.pad(x, ((0, 0), (0, pad_k))).astype(mxu_dtype)

    # Packed gamma/beta slab (8, 2*dp). Gammas padded with 1.0, betas with 0.0
    # (keeps padded columns exactly zero). Linear biases are NOT passed: they
    # cancel exactly under the training-mode BatchNorm that follows each Linear.
    row_g01 = jnp.concatenate([pad_row(params["g_id"], 1.0),
                               pad_row(params["g_1"], 1.0)], axis=1)
    row_b01 = jnp.concatenate([pad_row(params["be_id"]),
                               pad_row(params["be_1"])], axis=1)
    row_g2f = jnp.concatenate([pad_row(params["g_2"], 1.0),
                               pad_row(params["g_f"], 1.0)], axis=1)
    row_b2f = jnp.concatenate([pad_row(params["be_2"]),
                               pad_row(params["be_f"])], axis=1)
    p_packed = jnp.concatenate(
        [row_g01, row_b01, row_g2f, row_b2f, jnp.zeros((4, 2 * dp), jnp.float32)],
        axis=0).astype(jnp.float32)

    # Scoped VMEM budget: operands + ~8 live (B, dp)-scale f32 intermediates.
    bpe = jnp.dtype(mxu_dtype).itemsize
    est = (B * d_in_p * bpe + d_in_p * 2 * dp * bpe + dp * dp * bpe
           + 8 * 2 * dp * 4 + B * dp * x.dtype.itemsize + B * dp * 4 * 8)
    vmem_limit = int(min(64 * 1024 * 1024, max(2 * est, 4 * 1024 * 1024)))

    vmem = pl.BlockSpec(memory_space=pltpu.MemorySpace.VMEM)
    out_padded = pl.pallas_call(
        deepe_block_kernel,
        out_shape=jax.ShapeDtypeStruct((B, dp), x.dtype),
        in_specs=[vmem, vmem, vmem, vmem],
        out_specs=vmem,
        compiler_params=pltpu.CompilerParams(vmem_limit_bytes=vmem_limit),
    )(x_p, wcat, w2, p_packed)
    return out_padded[:, :d_out]


# ----------------------------- pure-JAX reference ---------------------------
def _bn_ref(h, gamma, beta):
    mean = jnp.mean(h, axis=0, keepdims=True)
    var = jnp.mean((h - mean) * (h - mean), axis=0, keepdims=True)
    return (h - mean) * jax.lax.rsqrt(var + EPS) * gamma + beta


def deepe_block_reference(x, p):
    """f32, two-pass-variance reference including the (BN-cancelled) biases."""
    xf = x.astype(jnp.float32)
    identity = xf @ p["wmap"] + p["bmap"]
    identity = _bn_ref(identity, p["g_id"], p["be_id"])
    h = xf @ p["w1"] + p["b1"]
    h = _bn_ref(h, p["g_1"], p["be_1"])
    h = jnp.maximum(h, 0.0)
    h = h @ p["w2"] + p["b2"]
    h = _bn_ref(h, p["g_2"], p["be_2"])
    out = identity + h
    return _bn_ref(out, p["g_f"], p["be_f"]).astype(x.dtype)


def init_params(key, d_in, d_out):
    """PyTorch-default init (Linear: U(+/-1/sqrt(fan_in)); BN: gamma=1, beta=0).
    Linear weights stored transposed as (in, out)."""
    ks = jax.random.split(key, 6)

    def linear(kw, kb, fan_in, fan_out):
        bound = 1.0 / jnp.sqrt(jnp.float32(fan_in))
        w = jax.random.uniform(kw, (fan_in, fan_out), jnp.float32, -bound, bound)
        b = jax.random.uniform(kb, (1, fan_out), jnp.float32, -bound, bound)
        return w, b

    wmap, bmap = linear(ks[0], ks[1], d_in, d_out)
    w1, b1 = linear(ks[2], ks[3], d_in, d_out)
    w2, b2 = linear(ks[4], ks[5], d_out, d_out)
    ones = jnp.ones((1, d_out), jnp.float32)
    zeros = jnp.zeros((1, d_out), jnp.float32)
    return dict(
        wmap=wmap, bmap=bmap, w1=w1, b1=b1, w2=w2, b2=b2,
        g_id=ones, be_id=zeros, g_1=ones, be_1=zeros,
        g_2=ones, be_2=zeros, g_f=ones, be_f=zeros,
    )


if __name__ == "__main__":
    # TODO(synk): benchmark/tune at production batch sizes via an xprof trace;
    # this small shape only exercises correctness.
    B, D_IN, D_OUT = 8, 32, 64
    key = jax.random.PRNGKey(0)
    k_x, k_p = jax.random.split(key)
    x = jax.random.normal(k_x, (B, D_IN), jnp.float32)
    params = init_params(k_p, D_IN, D_OUT)

    out = jax.block_until_ready(deepe_block(x, params))
    ref = jax.block_until_ready(deepe_block_reference(x, params))

    assert out.shape == (B, D_OUT), out.shape
    max_err = float(jnp.max(jnp.abs(out.astype(jnp.float32) - ref.astype(jnp.float32))))
    # Tolerance accounts for the bf16 MXU path vs the f32 reference.
    if max_err > 1e-1:
        raise AssertionError(f"Pallas output mismatch vs reference: {max_err}")

    print("KERNEL_OK")
</pallas_src>

<mosaic_0001>
module attributes {stable_mosaic.version = 11 : i64} {
  func.func @deepe_block_kernel(%arg0: memref<8x128xbf16, #tpu.memory_space<vmem>>, %arg1: memref<128x256xbf16, #tpu.memory_space<vmem>>, %arg2: memref<128x128xbf16, #tpu.memory_space<vmem>>, %arg3: memref<8x256xf32, #tpu.memory_space<vmem>>, %arg4: memref<8x128xf32, #tpu.memory_space<vmem>>) attributes {dimension_semantics = [], scalar_prefetch = 0 : i64, scratch_operands = 0 : i64, tpu.core_type = #tpu.core_type<tc>} {
    %c0 = arith.constant 0 : index
    %c0_0 = arith.constant 0 : index
    %0 = vector.load %arg3[%c0, %c0_0] : memref<8x256xf32, #tpu.memory_space<vmem>>, vector<8x256xf32>
    %cst = arith.constant 1.000000e+00 : f32
    %1 = vector.broadcast %cst : f32 to vector<8x8xf32>
    %c0_1 = arith.constant 0 : index
    %c0_2 = arith.constant 0 : index
    %2 = vector.load %arg0[%c0_1, %c0_2] : memref<8x128xbf16, #tpu.memory_space<vmem>>, vector<8x128xbf16>
    %c0_3 = arith.constant 0 : index
    %c0_4 = arith.constant 0 : index
    %3 = vector.load %arg1[%c0_3, %c0_4] : memref<128x256xbf16, #tpu.memory_space<vmem>>, vector<128x256xbf16>
    %cst_5 = arith.constant dense<0.000000e+00> : vector<8x256xf32>
    %4 = tpu.matmul %2, %3, %cst_5 {dimension_numbers = #tpu.dot_dimension_numbers<[1], [0], [0], [1], [0, 0, 1, 1], [], []>} : vector<8x128xbf16>, vector<128x256xbf16>, vector<8x256xf32> -> vector<8x256xf32>
    %cst_6 = arith.constant dense<0.000000e+00> : vector<8x256xf32>
    %5 = tpu.matmul %1, %4, %cst_6 {dimension_numbers = #tpu.dot_dimension_numbers<[1], [0], [0], [1], [0, 0, 1, 1], [], []>} : vector<8x8xf32>, vector<8x256xf32>, vector<8x256xf32> -> vector<8x256xf32>
    %6 = vector.extract_strided_slice %5 {offsets = [0, 0], sizes = [1, 256], strides = [1, 1]} : vector<8x256xf32> to vector<1x256xf32>
    %7 = arith.mulf %4, %4 : vector<8x256xf32>
    %cst_7 = arith.constant dense<0.000000e+00> : vector<8x256xf32>
    %8 = tpu.matmul %1, %7, %cst_7 {dimension_numbers = #tpu.dot_dimension_numbers<[1], [0], [0], [1], [0, 0, 1, 1], [], []>} : vector<8x8xf32>, vector<8x256xf32>, vector<8x256xf32> -> vector<8x256xf32>
    %9 = vector.extract_strided_slice %8 {offsets = [0, 0], sizes = [1, 256], strides = [1, 1]} : vector<8x256xf32> to vector<1x256xf32>
    %cst_8 = arith.constant 1.250000e-01 : f32
    %10 = vector.broadcast %cst_8 : f32 to vector<1x256xf32>
    %11 = arith.mulf %6, %10 : vector<1x256xf32>
    %cst_9 = arith.constant 1.250000e-01 : f32
    %12 = vector.broadcast %cst_9 : f32 to vector<1x256xf32>
    %13 = arith.mulf %9, %12 : vector<1x256xf32>
    %14 = arith.mulf %11, %11 : vector<1x256xf32>
    %15 = arith.subf %13, %14 : vector<1x256xf32>
    %cst_10 = arith.constant 0.000000e+00 : f32
    %16 = vector.broadcast %cst_10 : f32 to vector<1x256xf32>
    %17 = arith.maximumf %15, %16 : vector<1x256xf32>
    %18 = vector.extract_strided_slice %0 {offsets = [0, 0], sizes = [1, 256], strides = [1, 1]} : vector<8x256xf32> to vector<1x256xf32>
    %cst_11 = arith.constant 9.99999974E-6 : f32
    %19 = vector.broadcast %cst_11 : f32 to vector<1x256xf32>
    %20 = arith.addf %17, %19 : vector<1x256xf32>
    %21 = math.rsqrt %20 : vector<1x256xf32>
    %22 = arith.mulf %18, %21 : vector<1x256xf32>
    %23 = vector.extract_strided_slice %0 {offsets = [1, 0], sizes = [1, 256], strides = [1, 1]} : vector<8x256xf32> to vector<1x256xf32>
    %24 = arith.mulf %11, %22 : vector<1x256xf32>
    %25 = arith.subf %23, %24 : vector<1x256xf32>
    %26 = vector.extract_strided_slice %4 {offsets = [0, 128], sizes = [8, 128], strides = [1, 1]} : vector<8x256xf32> to vector<8x128xf32>
    %27 = vector.extract_strided_slice %22 {offsets = [0, 128], sizes = [1, 128], strides = [1, 1]} : vector<1x256xf32> to vector<1x128xf32>
    %28 = vector.broadcast %27 : vector<1x128xf32> to vector<8x128xf32>
    %29 = arith.mulf %26, %28 : vector<8x128xf32>
    %30 = vector.extract_strided_slice %25 {offsets = [0, 128], sizes = [1, 128], strides = [1, 1]} : vector<1x256xf32> to vector<1x128xf32>
    %31 = vector.broadcast %30 : vector<1x128xf32> to vector<8x128xf32>
    %32 = arith.addf %29, %31 : vector<8x128xf32>
    %cst_12 = arith.constant 0.000000e+00 : f32
    %33 = vector.broadcast %cst_12 : f32 to vector<8x128xf32>
    %34 = arith.maximumf %32, %33 : vector<8x128xf32>
    %35 = arith.truncf %34 : vector<8x128xf32> to vector<8x128xbf16>
    %c0_13 = arith.constant 0 : index
    %c0_14 = arith.constant 0 : index
    %36 = vector.load %arg2[%c0_13, %c0_14] : memref<128x128xbf16, #tpu.memory_space<vmem>>, vector<128x128xbf16>
    %cst_15 = arith.constant dense<0.000000e+00> : vector<8x128xf32>
    %37 = tpu.matmul %35, %36, %cst_15 {dimension_numbers = #tpu.dot_dimension_numbers<[1], [0], [0], [1], [0, 0, 1, 1], [], []>} : vector<8x128xbf16>, vector<128x128xbf16>, vector<8x128xf32> -> vector<8x128xf32>
    %cst_16 = arith.constant dense<0.000000e+00> : vector<8x128xf32>
    %38 = tpu.matmul %1, %37, %cst_16 {dimension_numbers = #tpu.dot_dimension_numbers<[1], [0], [0], [1], [0, 0, 1, 1], [], []>} : vector<8x8xf32>, vector<8x128xf32>, vector<8x128xf32> -> vector<8x128xf32>
    %39 = vector.extract_strided_slice %38 {offsets = [0, 0], sizes = [1, 128], strides = [1, 1]} : vector<8x128xf32> to vector<1x128xf32>
    %40 = arith.mulf %37, %37 : vector<8x128xf32>
    %cst_17 = arith.constant dense<0.000000e+00> : vector<8x128xf32>
    %41 = tpu.matmul %1, %40, %cst_17 {dimension_numbers = #tpu.dot_dimension_numbers<[1], [0], [0], [1], [0, 0, 1, 1], [], []>} : vector<8x8xf32>, vector<8x128xf32>, vector<8x128xf32> -> vector<8x128xf32>
    %42 = vector.extract_strided_slice %41 {offsets = [0, 0], sizes = [1, 128], strides = [1, 1]} : vector<8x128xf32> to vector<1x128xf32>
    %cst_18 = arith.constant 1.250000e-01 : f32
    %43 = vector.broadcast %cst_18 : f32 to vector<1x128xf32>
    %44 = arith.mulf %39, %43 : vector<1x128xf32>
    %cst_19 = arith.constant 1.250000e-01 : f32
    %45 = vector.broadcast %cst_19 : f32 to vector<1x128xf32>
    %46 = arith.mulf %42, %45 : vector<1x128xf32>
    %47 = arith.mulf %44, %44 : vector<1x128xf32>
    %48 = arith.subf %46, %47 : vector<1x128xf32>
    %cst_20 = arith.constant 0.000000e+00 : f32
    %49 = vector.broadcast %cst_20 : f32 to vector<1x128xf32>
    %50 = arith.maximumf %48, %49 : vector<1x128xf32>
    %51 = vector.extract_strided_slice %0 {offsets = [2, 0], sizes = [1, 128], strides = [1, 1]} : vector<8x256xf32> to vector<1x128xf32>
    %cst_21 = arith.constant 9.99999974E-6 : f32
    %52 = vector.broadcast %cst_21 : f32 to vector<1x128xf32>
    %53 = arith.addf %50, %52 : vector<1x128xf32>
    %54 = math.rsqrt %53 : vector<1x128xf32>
    %55 = arith.mulf %51, %54 : vector<1x128xf32>
    %56 = vector.extract_strided_slice %0 {offsets = [3, 0], sizes = [1, 128], strides = [1, 1]} : vector<8x256xf32> to vector<1x128xf32>
    %57 = arith.mulf %44, %55 : vector<1x128xf32>
    %58 = arith.subf %56, %57 : vector<1x128xf32>
    %59 = vector.extract_strided_slice %4 {offsets = [0, 0], sizes = [8, 128], strides = [1, 1]} : vector<8x256xf32> to vector<8x128xf32>
    %60 = vector.extract_strided_slice %22 {offsets = [0, 0], sizes = [1, 128], strides = [1, 1]} : vector<1x256xf32> to vector<1x128xf32>
    %61 = vector.broadcast %60 : vector<1x128xf32> to vector<8x128xf32>
    %62 = arith.mulf %59, %61 : vector<8x128xf32>
    %63 = vector.broadcast %55 : vector<1x128xf32> to vector<8x128xf32>
    %64 = arith.mulf %37, %63 : vector<8x128xf32>
    %65 = arith.addf %62, %64 : vector<8x128xf32>
    %66 = vector.extract_strided_slice %25 {offsets = [0, 0], sizes = [1, 128], strides = [1, 1]} : vector<1x256xf32> to vector<1x128xf32>
    %67 = arith.addf %66, %58 : vector<1x128xf32>
    %68 = vector.broadcast %67 : vector<1x128xf32> to vector<8x128xf32>
    %69 = arith.addf %65, %68 : vector<8x128xf32>
    %cst_22 = arith.constant dense<0.000000e+00> : vector<8x128xf32>
    %70 = tpu.matmul %1, %69, %cst_22 {dimension_numbers = #tpu.dot_dimension_numbers<[1], [0], [0], [1], [0, 0, 1, 1], [], []>} : vector<8x8xf32>, vector<8x128xf32>, vector<8x128xf32> -> vector<8x128xf32>
    %71 = vector.extract_strided_slice %70 {offsets = [0, 0], sizes = [1, 128], strides = [1, 1]} : vector<8x128xf32> to vector<1x128xf32>
    %72 = arith.mulf %69, %69 : vector<8x128xf32>
    %cst_23 = arith.constant dense<0.000000e+00> : vector<8x128xf32>
    %73 = tpu.matmul %1, %72, %cst_23 {dimension_numbers = #tpu.dot_dimension_numbers<[1], [0], [0], [1], [0, 0, 1, 1], [], []>} : vector<8x8xf32>, vector<8x128xf32>, vector<8x128xf32> -> vector<8x128xf32>
    %74 = vector.extract_strided_slice %73 {offsets = [0, 0], sizes = [1, 128], strides = [1, 1]} : vector<8x128xf32> to vector<1x128xf32>
    %cst_24 = arith.constant 1.250000e-01 : f32
    %75 = vector.broadcast %cst_24 : f32 to vector<1x128xf32>
    %76 = arith.mulf %71, %75 : vector<1x128xf32>
    %cst_25 = arith.constant 1.250000e-01 : f32
    %77 = vector.broadcast %cst_25 : f32 to vector<1x128xf32>
    %78 = arith.mulf %74, %77 : vector<1x128xf32>
    %79 = arith.mulf %76, %76 : vector<1x128xf32>
    %80 = arith.subf %78, %79 : vector<1x128xf32>
    %cst_26 = arith.constant 0.000000e+00 : f32
    %81 = vector.broadcast %cst_26 : f32 to vector<1x128xf32>
    %82 = arith.maximumf %80, %81 : vector<1x128xf32>
    %83 = vector.extract_strided_slice %0 {offsets = [2, 128], sizes = [1, 128], strides = [1, 1]} : vector<8x256xf32> to vector<1x128xf32>
    %cst_27 = arith.constant 9.99999974E-6 : f32
    %84 = vector.broadcast %cst_27 : f32 to vector<1x128xf32>
    %85 = arith.addf %82, %84 : vector<1x128xf32>
    %86 = math.rsqrt %85 : vector<1x128xf32>
    %87 = arith.mulf %83, %86 : vector<1x128xf32>
    %88 = vector.extract_strided_slice %0 {offsets = [3, 128], sizes = [1, 128], strides = [1, 1]} : vector<8x256xf32> to vector<1x128xf32>
    %89 = arith.mulf %76, %87 : vector<1x128xf32>
    %90 = arith.subf %88, %89 : vector<1x128xf32>
    %91 = vector.broadcast %87 : vector<1x128xf32> to vector<8x128xf32>
    %92 = arith.mulf %69, %91 : vector<8x128xf32>
    %93 = vector.broadcast %90 : vector<1x128xf32> to vector<8x128xf32>
    %94 = arith.addf %92, %93 : vector<8x128xf32>
    %c0_28 = arith.constant 0 : index
    %c0_29 = arith.constant 0 : index
    %95 = vector.load %arg4[%c0_28, %c0_29] : memref<8x128xf32, #tpu.memory_space<vmem>>, vector<8x128xf32>
    tpu.vector_store %arg4[%c0_28, %c0_29], %94 {strides = array<i32>} : memref<8x128xf32, #tpu.memory_space<vmem>>, vector<8x128xf32>,
    return
  }
}

</mosaic_0001>

<llo_original>
// kernel: tpu_custom_call.1
$region0: #{tpu_custom_call.1}
  #allocation0 [shape = 'u32[]', space=smem, size = 0x4, offset = 0x4, fixed_abs, tag = 'smem constant byte address 0x4 - core index']
  #allocation1 [shape = 'u32[72,128]{1,0:T(1,128)}', space=vmem, size = 0x9000, scoped, tag = 'internal scratch']
  %s0 = inlined_call_operand.hbm [shape: bf16[8,128], index: 0, kind: input, shape index: {}]
  %s1 = inlined_call_operand.hbm [shape: bf16[128,256], index: 1, kind: input, shape index: {}]
  %s2 = inlined_call_operand.hbm [shape: bf16[128,128], index: 2, kind: input, shape index: {}]
  %s3 = inlined_call_operand.hbm [shape: f32[8,256], index: 3, kind: input, shape index: {}]
  %s4 = inlined_call_operand.hbm [shape: f32[8,128], index: 4, kind: output, shape index: {}]
  %s5 = sld [smem:[#allocation0]]
  $region42: #{tpu_custom_call.1} parent=0
    _
  %s7 = ssub.s32 1, %s5
  %s8 = scalar_select 0, %s7, %s5
  $region1: #{tpu_custom_call.1} parent=0
    #allocation2 [shape = 'u8[2048]{0}', space=vmem, size = 0x800, scoped, tag = 'input window, operand 0, single buffered']
    #allocation3 [shape = 's32[1]{0}', space=sflag, size = 0x4, scoped, tag = 'scoped memory for tpu_custom_call.1']
    #allocation4 [shape = 's32[1]{0}', space=sflag, size = 0x4, scoped, tag = 'scoped memory for tpu_custom_call.1']
    #allocation5 [shape = 'u8[65536]{0}', space=vmem, size = 0x10000, scoped, tag = 'input window, operand 1, single buffered']
    #allocation6 [shape = 's32[1]{0}', space=sflag, size = 0x4, scoped, tag = 'scoped memory for tpu_custom_call.1']
    #allocation7 [shape = 'u8[32768]{0}', space=vmem, size = 0x8000, scoped, tag = 'input window, operand 2, single buffered']
    #allocation8 [shape = 'u8[8192]{0}', space=vmem, size = 0x2000, scoped, tag = 'input window, operand 3, single buffered']
    #allocation9 [shape = 's32[1]{0}', space=sflag, size = 0x4, scoped, tag = 'scoped memory for tpu_custom_call.1']
    #allocation10 [shape = 'u8[4096]{0}', space=vmem, size = 0x1000, scoped, tag = 'output window, operand 0, single buffered']
    %9 = vsyncpa [#allocation3], 0
    %10 = vsyncpa [#allocation6], 0
    %11 = vsyncpa [#allocation9], 0
    %12 = vsyncpa [#allocation4], 0
    // Predicated region
    $region2: #{tpu_custom_call.1} parent=1 // pred_check
      _
    $region3: #{tpu_custom_call.1} parent=1 // pred_check_branch
      %14 = sbr.rel (0) target = $region5
    $region4: #{tpu_custom_call.1} parent=1 // pred_region
      %16 = vsyncadd [#allocation3], 0
      %s18 = sshll.u32 %s0, 4
      %s19 = int_to_ptr.hbm [resolvable:$true] %s18
      %s20 = sshll.u32 [#allocation2], 4
      %s21 = int_to_ptr.vmem [resolvable:$true] %s20
      %23 = dma.hbm_to_vmem [thread:$0]  %s19, 64, %s21, [#allocation3]
    $region5: #{tpu_custom_call.1} parent=1 // pred_fallthru
      _
    // Predicated region
    $region6: #{tpu_custom_call.1} parent=1 // pred_check
      _
    $region7: #{tpu_custom_call.1} parent=1 // pred_check_branch
      %25 = sbr.rel (0) target = $region9
    $region8: #{tpu_custom_call.1} parent=1 // pred_region
      %27 = vsyncadd [#allocation6], 0
      %s28 = sshll.u32 %s1, 4
      %s29 = int_to_ptr.hbm [resolvable:$true] %s28
      %s30 = sshll.u32 [#allocation5], 4
      %s31 = int_to_ptr.vmem [resolvable:$true] %s30
      %36 = dma.hbm_to_vmem [thread:$0]  %s29, 2048, %s31, [#allocation6], 128, 128, 8
    $region9: #{tpu_custom_call.1} parent=1 // pred_fallthru
      _
    // Predicated region
    $region10: #{tpu_custom_call.1} parent=1 // pred_check
      _
    $region11: #{tpu_custom_call.1} parent=1 // pred_check_branch
      %38 = sbr.rel (0) target = $region13
    $region12: #{tpu_custom_call.1} parent=1 // pred_region
      %40 = vsyncadd [#allocation6], 0
      %s41 = sshll.u32 %s2, 4
      %s42 = int_to_ptr.hbm [resolvable:$true] %s41
      %s43 = sshll.u32 [#allocation7], 4
      %s44 = int_to_ptr.vmem [resolvable:$true] %s43
      %49 = dma.hbm_to_vmem [thread:$0]  %s42, 1024, %s44, [#allocation6], 64, 64, 4
    $region13: #{tpu_custom_call.1} parent=1 // pred_fallthru
      _
    // Predicated region
    $region14: #{tpu_custom_call.1} parent=1 // pred_check
      _
    $region15: #{tpu_custom_call.1} parent=1 // pred_check_branch
      %51 = sbr.rel (0) target = $region17
    $region16: #{tpu_custom_call.1} parent=1 // pred_region
      %53 = vsyncadd [#allocation9], 0
      %s55 = sshll.u32 %s3, 4
      %s56 = int_to_ptr.hbm [resolvable:$true] %s55
      %s57 = sshll.u32 [#allocation8], 4
      %s58 = int_to_ptr.vmem [resolvable:$true] %s57
      %60 = dma.hbm_to_vmem [thread:$0]  %s56, 256, %s58, [#allocation9]
    $region17: #{tpu_custom_call.1} parent=1 // pred_fallthru
      _
    // Predicated region
    $region18: #{tpu_custom_call.1} parent=1 // pred_check
      _
    $region19: #{tpu_custom_call.1} parent=1 // pred_check_branch
      %62 = sbr.rel (0) target = $region21
    $region20: #{tpu_custom_call.1} parent=1 // pred_region
      %64 = dma.done [#allocation3], 64
    $region21: #{tpu_custom_call.1} parent=1 // pred_fallthru
      _
    // Predicated region
    $region22: #{tpu_custom_call.1} parent=1 // pred_check
      _
    $region23: #{tpu_custom_call.1} parent=1 // pred_check_branch
      %66 = sbr.rel (0) target = $region25
    $region24: #{tpu_custom_call.1} parent=1 // pred_region
      %68 = dma.done [#allocation6], 2048
    $region25: #{tpu_custom_call.1} parent=1 // pred_fallthru
      _
    // Predicated region
    $region26: #{tpu_custom_call.1} parent=1 // pred_check
      _
    $region27: #{tpu_custom_call.1} parent=1 // pred_check_branch
      %70 = sbr.rel (0) target = $region29
    $region28: #{tpu_custom_call.1} parent=1 // pred_region
      %72 = dma.done [#allocation6], 1024
    $region29: #{tpu_custom_call.1} parent=1 // pred_fallthru
      _
    // Predicated region
    $region30: #{tpu_custom_call.1} parent=1 // pred_check
      _
    $region31: #{tpu_custom_call.1} parent=1 // pred_check_branch
      %74 = sbr.rel (0) target = $region33
    $region32: #{tpu_custom_call.1} parent=1 // pred_region
      %76 = dma.done [#allocation9], 256
    $region33: #{tpu_custom_call.1} parent=1 // pred_fallthru
      _
    %v77 = vld [vmem:[#allocation8] sm:$0xff]
    %v78 = vld [vmem:[#allocation8 + $0x8] sm:$0xff]
    %v79 = vld [vmem:[#allocation2] sm:$0xf]
    %v80 = vld [vmem:[#allocation5] sm:$0xff]
    %v81 = vld [vmem:[#allocation5 + $0x8] sm:$0xff]
    %v82 = vld [vmem:[#allocation5 + $0x10] sm:$0xff]
    %v83 = vld [vmem:[#allocation5 + $0x18] sm:$0xff]
    %v84 = vld [vmem:[#allocation5 + $0x20] sm:$0xff]
    %v85 = vld [vmem:[#allocation5 + $0x28] sm:$0xff]
    %v86 = vld [vmem:[#allocation5 + $0x30] sm:$0xff]
    %v87 = vld [vmem:[#allocation5 + $0x38] sm:$0xff]
    %v88 = vld [vmem:[#allocation5 + $0x40] sm:$0xff]
    %v89 = vld [vmem:[#allocation5 + $0x48] sm:$0xff]
    %v90 = vld [vmem:[#allocation5 + $0x50] sm:$0xff]
    %v91 = vld [vmem:[#allocation5 + $0x58] sm:$0xff]
    %v92 = vld [vmem:[#allocation5 + $0x60] sm:$0xff]
    %v93 = vld [vmem:[#allocation5 + $0x68] sm:$0xff]
    %v94 = vld [vmem:[#allocation5 + $0x70] sm:$0xff]
    %v95 = vld [vmem:[#allocation5 + $0x78] sm:$0xff]
    %v112 = vunpack.c.l.b16 %v80
    %v113 = vunpack.c.h.b16 %v80
    %v114 = vunpack.c.l.b16 %v81
    %v115 = vunpack.c.h.b16 %v81
    %v116 = vunpack.c.l.b16 %v82
    %v117 = vunpack.c.h.b16 %v82
    %v118 = vunpack.c.l.b16 %v83
    %v119 = vunpack.c.h.b16 %v83
    %v120 = vunpack.c.l.b16 %v84
    %v121 = vunpack.c.h.b16 %v84
    %v122 = vunpack.c.l.b16 %v85
    %v123 = vunpack.c.h.b16 %v85
    %v124 = vunpack.c.l.b16 %v86
    %v125 = vunpack.c.h.b16 %v86
    %v126 = vunpack.c.l.b16 %v87
    %v127 = vunpack.c.h.b16 %v87
    %v128 = vunpack.c.l.b16 %v88
    %v129 = vunpack.c.h.b16 %v88
    %v130 = vunpack.c.l.b16 %v89
    %v131 = vunpack.c.h.b16 %v89
    %v132 = vunpack.c.l.b16 %v90
    %v133 = vunpack.c.h.b16 %v90
    %v134 = vunpack.c.l.b16 %v91
    %v135 = vunpack.c.h.b16 %v91
    %v136 = vunpack.c.l.b16 %v92
    %v137 = vunpack.c.h.b16 %v92
    %v138 = vunpack.c.l.b16 %v93
    %v139 = vunpack.c.h.b16 %v93
    %v140 = vunpack.c.l.b16 %v94
    %v141 = vunpack.c.h.b16 %v94
    %v142 = vunpack.c.l.b16 %v95
    %v143 = vunpack.c.h.b16 %v95
    %v144 = vpack.c.b16 %v114, %v112
    %v145 = vpack.c.b16 %v115, %v113
    %v146 = vpack.c.b16 %v118, %v116
    %v147 = vpack.c.b16 %v119, %v117
    %v148 = vpack.c.b16 %v122, %v120
    %v149 = vpack.c.b16 %v123, %v121
    %v150 = vpack.c.b16 %v126, %v124
    %v151 = vpack.c.b16 %v127, %v125
    %v152 = vpack.c.b16 %v130, %v128
    %v153 = vpack.c.b16 %v131, %v129
    %v154 = vpack.c.b16 %v134, %v132
    %v155 = vpack.c.b16 %v135, %v133
    %v156 = vpack.c.b16 %v138, %v136
    %v157 = vpack.c.b16 %v139, %v137
    %v158 = vpack.c.b16 %v142, %v140
    %v159 = vpack.c.b16 %v143, %v141
    %176 = vmatpush.bf16.msra.mxu0 %v158
    %177 = vmatpush.bf16.msra.mxu0 %v156
    %178 = vmatpush.bf16.msra.mxu0 %v154
    %179 = vmatpush.bf16.msra.mxu0 %v152
    %180 = vmatpush.bf16.msra.mxu0 %v150
    %181 = vmatpush.bf16.msra.mxu0 %v148
    %182 = vmatpush.bf16.msra.mxu0 %v146
    %183 = vmatpush.bf16.msra.mxu0 %v144
    %184 = vmatmul.bf16.gmra.mxu0 %v79
    %v185 = vpop.f32.mrf.mxu0
    %v186 = vadd.f32 0.0, %v185
    %v187 = vpop.f32.mrf.mxu0
    %188 = vdwg.mxu0
    %189 = vmatpush.bf16.msra.mxu0 %v159
    %190 = vmatpush.bf16.msra.mxu0 %v157
    %191 = vmatpush.bf16.msra.mxu0 %v155
    %192 = vmatpush.bf16.msra.mxu0 %v153
    %193 = vmatpush.bf16.msra.mxu0 %v151
    %194 = vmatpush.bf16.msra.mxu0 %v149
    %195 = vmatpush.bf16.msra.mxu0 %v147
    %196 = vmatpush.bf16.msra.mxu0 %v145
    %197 = vmatmul.bf16.gmra.mxu0 %v79
    %v198 = vpop.f32.mrf.mxu0
    %v199 = vadd.f32 0.0, %v198
    %v200 = vpop.f32.mrf.mxu0
    %201 = vdwg.mxu0
    %vm202 = vcmask 64512
    %v204 = vsel %vm202, 1.0, 0
    %206 = vmatpush.msra.mxu0 0.0
    %207 = vmatpush.msra.mxu0 0.0
    %208 = vmatpush.msra.mxu0 0.0
    %209 = vmatpush.msra.mxu0 0.0
    %210 = vmatpush.msra.mxu0 0.0
    %211 = vmatpush.msra.mxu0 0.0
    %212 = vmatpush.msra.mxu0 0.0
    %213 = vmatpush.msra.mxu0 0.0
    %214 = vmatpush.msra.mxu0 0.0
    %215 = vmatpush.msra.mxu0 0.0
    %216 = vmatpush.msra.mxu0 0.0
    %217 = vmatpush.msra.mxu0 0.0
    %218 = vmatpush.msra.mxu0 0.0
    %219 = vmatpush.msra.mxu0 0.0
    %220 = vmatpush.msra.mxu0 0.0
    %221 = vmatpush.msra.mxu0 %v186
    %222 = vmatmul.f32.gmra.mxu0 %v204
    %v223 = vpop.f32.mrf.mxu0
    %v224 = vadd.f32 0.0, %v223
    %225 = vdwg.mxu0
    %226 = vmatpush.msra.mxu0 0.0
    %227 = vmatpush.msra.mxu0 0.0
    %228 = vmatpush.msra.mxu0 0.0
    %229 = vmatpush.msra.mxu0 0.0
    %230 = vmatpush.msra.mxu0 0.0
    %231 = vmatpush.msra.mxu0 0.0
    %232 = vmatpush.msra.mxu0 0.0
    %233 = vmatpush.msra.mxu0 0.0
    %234 = vmatpush.msra.mxu0 0.0
    %235 = vmatpush.msra.mxu0 0.0
    %236 = vmatpush.msra.mxu0 0.0
    %237 = vmatpush.msra.mxu0 0.0
    %238 = vmatpush.msra.mxu0 0.0
    %239 = vmatpush.msra.mxu0 0.0
    %240 = vmatpush.msra.mxu0 0.0
    %241 = vmatpush.msra.mxu0 %v199
    %242 = vmatmul.f32.gmra.mxu0 %v204
    %v243 = vpop.f32.mrf.mxu0
    %v244 = vadd.f32 0.0, %v243
    %245 = vdwg.mxu0
    %v246 = vmul.f32 %v186, %v186
    %v247 = vmul.f32 %v199, %v199
    %248 = vmatpush.msra.mxu0 0.0
    %249 = vmatpush.msra.mxu0 0.0
    %250 = vmatpush.msra.mxu0 0.0
    %251 = vmatpush.msra.mxu0 0.0
    %252 = vmatpush.msra.mxu0 0.0
    %253 = vmatpush.msra.mxu0 0.0
    %254 = vmatpush.msra.mxu0 0.0
    %255 = vmatpush.msra.mxu0 0.0
    %256 = vmatpush.msra.mxu0 0.0
    %257 = vmatpush.msra.mxu0 0.0
    %258 = vmatpush.msra.mxu0 0.0
    %259 = vmatpush.msra.mxu0 0.0
    %260 = vmatpush.msra.mxu0 0.0
    %261 = vmatpush.msra.mxu0 0.0
    %262 = vmatpush.msra.mxu0 0.0
    %263 = vmatpush.msra.mxu0 %v246
    %264 = vmatmul.f32.gmra.mxu0 %v204
    %v265 = vpop.f32.mrf.mxu0
    %v266 = vadd.f32 0.0, %v265
    %267 = vdwg.mxu0
    %268 = vmatpush.msra.mxu0 0.0
    %269 = vmatpush.msra.mxu0 0.0
    %270 = vmatpush.msra.mxu0 0.0
    %271 = vmatpush.msra.mxu0 0.0
    %272 = vmatpush.msra.mxu0 0.0
    %273 = vmatpush.msra.mxu0 0.0
    %274 = vmatpush.msra.mxu0 0.0
    %275 = vmatpush.msra.mxu0 0.0
    %276 = vmatpush.msra.mxu0 0.0
    %277 = vmatpush.msra.mxu0 0.0
    %278 = vmatpush.msra.mxu0 0.0
    %279 = vmatpush.msra.mxu0 0.0
    %280 = vmatpush.msra.mxu0 0.0
    %281 = vmatpush.msra.mxu0 0.0
    %282 = vmatpush.msra.mxu0 0.0
    %283 = vmatpush.msra.mxu0 %v247
    %284 = vmatmul.f32.gmra.mxu0 %v204
    %v285 = vpop.f32.mrf.mxu0
    %v286 = vadd.f32 0.0, %v285
    %287 = vdwg.mxu0
    %v288 = vmul.f32 %v224, 0.125
    %v289 = vmul.f32 %v244, 0.125
    %v290 = vmul.f32 %v266, 0.125
    %v291 = vmul.f32 %v286, 0.125
    %v292 = vmul.f32 %v288, %v288
    %v293 = vmul.f32 %v289, %v289
    %v294 = vsub.f32 %v290, %v292
    %v295 = vsub.f32 %v291, %v293
    %v296 = vmax.f32 %v294, 0.0
    %v297 = vmax.f32 %v295, 0.0
    %v298 = vadd.f32 %v296, 1e-05
    %v299 = vadd.f32 %v297, 1e-05
    %v300 = vrsqrt.pop %v298
    %v301 = vmul.f32 %v300, %v298
    %v302 = vmul.f32 %v301, %v300
    %v303 = vmul.f32 0.5, %v302
    %v304 = vsub.f32 1.5, %v303
    %v305 = vmul.f32 %v300, %v304
    %vm306 = vweird.f32 %v298
    %vm307 = vweird.f32 %v300
    %vm308 = vmor %vm306, %vm307
    %v309 = vsel %vm308, %v300, %v305
    %v310 = vrsqrt.pop %v299
    %v311 = vmul.f32 %v310, %v299
    %v312 = vmul.f32 %v311, %v310
    %v313 = vmul.f32 0.5, %v312
    %v314 = vsub.f32 1.5, %v313
    %v315 = vmul.f32 %v310, %v314
    %vm316 = vweird.f32 %v299
    %vm317 = vweird.f32 %v310
    %vm318 = vmor %vm316, %vm317
    %v319 = vsel %vm318, %v310, %v315
    %v320 = vmul.f32 %v77, %v309
    %v321 = vmul.f32 %v78, %v319
    %v322 = vmul.f32 %v288, %v320
    %v323 = vmul.f32 %v289, %v321
    %v326 = vrot.slane %v322, 7
    %v327 = vrot.slane %v323, 7
    %v330 = vsub.f32 %v77, %v326
    %v331 = vsub.f32 %v78, %v327
    %v332 = vperm.slane %v321, 0
    %v333 = vmul.f32 %v199, %v332
    %v334 = vperm.slane %v331, 1
    %v335 = vadd.f32 %v333, %v334
    %v336 = vmax.f32 %v335, 0.0
    %v337 = vpack.c.bf16 %v336, %v336
    %v338 = vld [vmem:[#allocation7] sm:$0xf]
    %v339 = vld [vmem:[#allocation7 + $0x4] sm:$0xf]
    %v340 = vld [vmem:[#allocation7 + $0x8] sm:$0xf]
    %v341 = vld [vmem:[#allocation7 + $0xc] sm:$0xf]
    %v342 = vld [vmem:[#allocation7 + $0x10] sm:$0xf]
    %v343 = vld [vmem:[#allocation7 + $0x14] sm:$0xf]
    %v344 = vld [vmem:[#allocation7 + $0x18] sm:$0xf]
    %v345 = vld [vmem:[#allocation7 + $0x1c] sm:$0xf]
    %v346 = vld [vmem:[#allocation7 + $0x20] sm:$0xf]
    %v347 = vld [vmem:[#allocation7 + $0x24] sm:$0xf]
    %v348 = vld [vmem:[#allocation7 + $0x28] sm:$0xf]
    %v349 = vld [vmem:[#allocation7 + $0x2c] sm:$0xf]
    %v350 = vld [vmem:[#allocation7 + $0x30] sm:$0xf]
    %v351 = vld [vmem:[#allocation7 + $0x34] sm:$0xf]
    %v352 = vld [vmem:[#allocation7 + $0x38] sm:$0xf]
    %v353 = vld [vmem:[#allocation7 + $0x3c] sm:$0xf]
    %v370 = vunpack.c.l.b16 %v338
    %v371 = vunpack.c.l.b16 %v339
    %v372 = vunpack.c.l.b16 %v340
    %v373 = vunpack.c.l.b16 %v341
    %v374 = vunpack.c.l.b16 %v342
    %v375 = vunpack.c.l.b16 %v343
    %v376 = vunpack.c.l.b16 %v344
    %v377 = vunpack.c.l.b16 %v345
    %v378 = vunpack.c.l.b16 %v346
    %v379 = vunpack.c.l.b16 %v347
    %v380 = vunpack.c.l.b16 %v348
    %v381 = vunpack.c.l.b16 %v349
    %v382 = vunpack.c.l.b16 %v350
    %v383 = vunpack.c.l.b16 %v351
    %v384 = vunpack.c.l.b16 %v352
    %v385 = vunpack.c.l.b16 %v353
    %v386 = vpack.c.b16 %v371, %v370
    %v387 = vpack.c.b16 %v373, %v372
    %v388 = vpack.c.b16 %v375, %v374
    %v389 = vpack.c.b16 %v377, %v376
    %v390 = vpack.c.b16 %v379, %v378
    %v391 = vpack.c.b16 %v381, %v380
    %v392 = vpack.c.b16 %v383, %v382
    %v393 = vpack.c.b16 %v385, %v384
    %402 = vmatpush.bf16.msra.mxu0 %v393
    %403 = vmatpush.bf16.msra.mxu0 %v392
    %404 = vmatpush.bf16.msra.mxu0 %v391
    %405 = vmatpush.bf16.msra.mxu0 %v390
    %406 = vmatpush.bf16.msra.mxu0 %v389
    %407 = vmatpush.bf16.msra.mxu0 %v388
    %408 = vmatpush.bf16.msra.mxu0 %v387
    %409 = vmatpush.bf16.msra.mxu0 %v386
    %410 = vmatmul.bf16.gmra.mxu0 %v337
    %v411 = vpop.f32.mrf.mxu0
    %v412 = vadd.f32 0.0, %v411
    %v413 = vpop.f32.mrf.mxu0
    %414 = vdwg.mxu0
    %415 = vmatpush.msra.mxu0 0.0
    %416 = vmatpush.msra.mxu0 0.0
    %417 = vmatpush.msra.mxu0 0.0
    %418 = vmatpush.msra.mxu0 0.0
    %419 = vmatpush.msra.mxu0 0.0
    %420 = vmatpush.msra.mxu0 0.0
    %421 = vmatpush.msra.mxu0 0.0
    %422 = vmatpush.msra.mxu0 0.0
    %423 = vmatpush.msra.mxu0 0.0
    %424 = vmatpush.msra.mxu0 0.0
    %425 = vmatpush.msra.mxu0 0.0
    %426 = vmatpush.msra.mxu0 0.0
    %427 = vmatpush.msra.mxu0 0.0
    %428 = vmatpush.msra.mxu0 0.0
    %429 = vmatpush.msra.mxu0 0.0
    %430 = vmatpush.msra.mxu0 %v412
    %431 = vmatmul.f32.gmra.mxu0 %v204
    %v432 = vpop.f32.mrf.mxu0
    %v433 = vadd.f32 0.0, %v432
    %434 = vdwg.mxu0
    %v435 = vmul.f32 %v412, %v412
    %436 = vmatpush.msra.mxu0 0.0
    %437 = vmatpush.msra.mxu0 0.0
    %438 = vmatpush.msra.mxu0 0.0
    %439 = vmatpush.msra.mxu0 0.0
    %440 = vmatpush.msra.mxu0 0.0
    %441 = vmatpush.msra.mxu0 0.0
    %442 = vmatpush.msra.mxu0 0.0
    %443 = vmatpush.msra.mxu0 0.0
    %444 = vmatpush.msra.mxu0 0.0
    %445 = vmatpush.msra.mxu0 0.0
    %446 = vmatpush.msra.mxu0 0.0
    %447 = vmatpush.msra.mxu0 0.0
    %448 = vmatpush.msra.mxu0 0.0
    %449 = vmatpush.msra.mxu0 0.0
    %450 = vmatpush.msra.mxu0 0.0
    %451 = vmatpush.msra.mxu0 %v435
    %452 = vmatmul.f32.gmra.mxu0 %v204
    %v453 = vpop.f32.mrf.mxu0
    %v454 = vadd.f32 0.0, %v453
    %455 = vdwg.mxu0
    %v456 = vmul.f32 %v433, 0.125
    %v457 = vmul.f32 %v454, 0.125
    %v458 = vmul.f32 %v456, %v456
    %v459 = vsub.f32 %v457, %v458
    %v460 = vmax.f32 %v459, 0.0
    %v461 = vadd.f32 %v460, 1e-05
    %v462 = vrsqrt.pop %v461
    %v463 = vmul.f32 %v462, %v461
    %v464 = vmul.f32 %v463, %v462
    %v465 = vmul.f32 0.5, %v464
    %v466 = vsub.f32 1.5, %v465
    %v467 = vmul.f32 %v462, %v466
    %vm468 = vweird.f32 %v461
    %vm469 = vweird.f32 %v462
    %vm470 = vmor %vm468, %vm469
    %v471 = vsel %vm470, %v462, %v467
    %v473 = vrot.slane %v471, 6
    %v475 = vmul.f32 %v77, %v473
    %v477 = vrot.slane %v475, 2
    %v479 = vmul.f32 %v456, %v477
    %v481 = vrot.slane %v479, 5
    %v483 = vsub.f32 %v77, %v481
    %v484 = vperm.slane %v320, 0
    %v485 = vmul.f32 %v186, %v484
    %v486 = vperm.slane %v475, 2
    %v487 = vmul.f32 %v412, %v486
    %v488 = vadd.f32 %v485, %v487
    %v490 = vrot.slane %v483, 2
    %v492 = vadd.f32 %v330, %v490
    %v493 = vperm.slane %v492, 1
    %v494 = vadd.f32 %v488, %v493
    %495 = vmatpush.msra.mxu0 0.0
    %496 = vmatpush.msra.mxu0 0.0
    %497 = vmatpush.msra.mxu0 0.0
    %498 = vmatpush.msra.mxu0 0.0
    %499 = vmatpush.msra.mxu0 0.0
    %500 = vmatpush.msra.mxu0 0.0
    %501 = vmatpush.msra.mxu0 0.0
    %502 = vmatpush.msra.mxu0 0.0
    %503 = vmatpush.msra.mxu0 0.0
    %504 = vmatpush.msra.mxu0 0.0
    %505 = vmatpush.msra.mxu0 0.0
    %506 = vmatpush.msra.mxu0 0.0
    %507 = vmatpush.msra.mxu0 0.0
    %508 = vmatpush.msra.mxu0 0.0
    %509 = vmatpush.msra.mxu0 0.0
    %510 = vmatpush.msra.mxu0 %v494
    %511 = vmatmul.f32.gmra.mxu0 %v204
    %v512 = vpop.f32.mrf.mxu0
    %v513 = vadd.f32 0.0, %v512
    %514 = vdwg.mxu0
    %v515 = vmul.f32 %v494, %v494
    %516 = vmatpush.msra.mxu0 0.0
    %517 = vmatpush.msra.mxu0 0.0
    %518 = vmatpush.msra.mxu0 0.0
    %519 = vmatpush.msra.mxu0 0.0
    %520 = vmatpush.msra.mxu0 0.0
    %521 = vmatpush.msra.mxu0 0.0
    %522 = vmatpush.msra.mxu0 0.0
    %523 = vmatpush.msra.mxu0 0.0
    %524 = vmatpush.msra.mxu0 0.0
    %525 = vmatpush.msra.mxu0 0.0
    %526 = vmatpush.msra.mxu0 0.0
    %527 = vmatpush.msra.mxu0 0.0
    %528 = vmatpush.msra.mxu0 0.0
    %529 = vmatpush.msra.mxu0 0.0
    %530 = vmatpush.msra.mxu0 0.0
    %531 = vmatpush.msra.mxu0 %v515
    %532 = vmatmul.f32.gmra.mxu0 %v204
    %v533 = vpop.f32.mrf.mxu0
    %v534 = vadd.f32 0.0, %v533
    %535 = vdwg.mxu0
    %v536 = vmul.f32 %v513, 0.125
    %v537 = vmul.f32 %v534, 0.125
    %v538 = vmul.f32 %v536, %v536
    %v539 = vsub.f32 %v537, %v538
    %v540 = vmax.f32 %v539, 0.0
    %v541 = vadd.f32 %v540, 1e-05
    %v542 = vrsqrt.pop %v541
    %v543 = vmul.f32 %v542, %v541
    %v544 = vmul.f32 %v543, %v542
    %v545 = vmul.f32 0.5, %v544
    %v546 = vsub.f32 1.5, %v545
    %v547 = vmul.f32 %v542, %v546
    %vm548 = vweird.f32 %v541
    %vm549 = vweird.f32 %v542
    %vm550 = vmor %vm548, %vm549
    %v551 = vsel %vm550, %v542, %v547
    %v553 = vrot.slane %v551, 6
    %v555 = vmul.f32 %v78, %v553
    %v557 = vrot.slane %v555, 2
    %v559 = vmul.f32 %v536, %v557
    %v561 = vrot.slane %v559, 5
    %v563 = vsub.f32 %v78, %v561
    %v564 = vperm.slane %v555, 2
    %v565 = vmul.f32 %v494, %v564
    %v566 = vperm.slane %v563, 3
    %v567 = vadd.f32 %v565, %v566
    %568 = vst [vmem:[#allocation10] sm:$0xff] %v567
    // Predicated region
    $region34: #{tpu_custom_call.1} parent=1 // pred_check
      _
    $region35: #{tpu_custom_call.1} parent=1 // pred_check_branch
      %570 = sbr.rel (0) target = $region37
    $region36: #{tpu_custom_call.1} parent=1 // pred_region
      %572 = vsyncadd [#allocation4], 0
      %s574 = sshll.u32 [#allocation10], 4
      %s575 = int_to_ptr.vmem [resolvable:$true] %s574
      %s576 = sshll.u32 %s4, 4
      %s577 = int_to_ptr.hbm [resolvable:$true] %s576
      %579 = dma.vmem_to_hbm [thread:$0]  %s575, 128, %s577, [#allocation4]
    $region37: #{tpu_custom_call.1} parent=1 // pred_fallthru
      _
    // Predicated region
    $region38: #{tpu_custom_call.1} parent=1 // pred_check
      _
    $region39: #{tpu_custom_call.1} parent=1 // pred_check_branch
      %581 = sbr.rel (0) target = $region41
    $region40: #{tpu_custom_call.1} parent=1 // pred_region
      %583 = dma.done [#allocation4], 128
    $region41: #{tpu_custom_call.1} parent=1 // pred_fallthru
      _
    %584 = vsyncpa [#allocation3], 1
    %585 = vsyncpa [#allocation6], 1
    %586 = vsyncpa [#allocation9], 1
    %587 = vsyncpa [#allocation4], 1

</llo_original>
